<compile_context>
chip_gen: v6e
topology: v6e:2x2x1
jax: 0.10.0
libtpu: 0.0.40
codegen_flags: <defaults>
</compile_context>

<pallas_src>
import math

import jax
import jax.numpy as jnp
from jax import lax
from jax.experimental import pallas as pl
from jax.experimental.pallas import tpu as pltpu


_INV_SQRT2 = float(1.0 / math.sqrt(2.0))
_SQRT_2_OVER_PI = float(math.sqrt(2.0 / math.pi))


def _gelu_exact_kernel(x_ref, o_ref):
    """Exact GELU: x * (0.5 + 0.5 * erf(x / sqrt(2))), computed in f32."""
    xf = x_ref[...].astype(jnp.float32)
    y = xf * (jnp.float32(0.5)
              + jnp.float32(0.5) * lax.erf(xf * jnp.float32(_INV_SQRT2)))
    o_ref[...] = y.astype(o_ref.dtype)


def _gelu_tanh_kernel(x_ref, o_ref):
    """Tanh-approx GELU (OpenAI GPT variant); transcendental goes to the EUP."""
    xf = x_ref[...].astype(jnp.float32)
    inner = jnp.float32(_SQRT_2_OVER_PI) * (
        xf + jnp.float32(0.044715) * xf * xf * xf)
    y = jnp.float32(0.5) * xf * (jnp.float32(1.0) + jnp.tanh(inner))
    o_ref[...] = y.astype(o_ref.dtype)


def _sublane_multiple(dtype) -> int:
    itemsize = jnp.dtype(dtype).itemsize
    if itemsize >= 4:
        return 8
    if itemsize == 2:
        return 16
    return 32


def _vmem_capacity_bytes() -> int:
    try:
        cap = int(pltpu.get_tpu_info().vmem_capacity_bytes)
    except Exception:
        cap = 64 << 20  # conservative default (v7x per-TensorCore)
    return min(cap, 128 << 20)


def _pick_row_tile(rows: int, cols: int, itemsize: int, sub: int,
                   block_budget: int) -> int:
    """Largest sublane-aligned row tile fitting the VMEM budget.

    Prefers an exact divisor of `rows` only if it stays large (guard against
    rows = sub * prime degenerating to tiny tiles), keeps >= ~8 grid steps on
    big inputs, and nudges the step count to an even value when cheap (v7x
    megacore balance).
    """
    if rows <= sub:
        return rows
    row_bytes = cols * itemsize

    max_tm = max(block_budget // row_bytes, sub)
    max_tm = max((max_tm // sub) * sub, sub)
    max_tm = min(max_tm, pl.cdiv(rows, sub) * sub)

    # Never shrink below ~256 KiB per buffer (stays near HBM roofline).
    min_tm = max(sub, ((256 * 1024) // row_bytes) // sub * sub)
    min_tm = min(min_tm, max_tm)

    # Keep enough (even) grid steps for megacore sharding + pipeline overlap.
    target_steps = 8
    if pl.cdiv(rows, max_tm) < target_steps:
        alt = max((rows // target_steps) // sub * sub, min_tm)
        max_tm = max(min(max_tm, alt), sub)

    tm = max_tm
    floor_tm = max(min_tm, max_tm // 2)

    # Prefer a tile that divides rows evenly, but only if it stays big enough;
    # otherwise keep max_tm (Pallas masks the ragged last block's OOB writes).
    cand = max_tm
    while cand > sub and rows % cand != 0:
        cand -= sub
    if rows % cand == 0 and cand >= floor_tm:
        tm = cand

    # v7x megacore: prefer an even number of row steps when it's cheap.
    steps = pl.cdiv(rows, tm)
    if steps > 1 and steps % 2 == 1:
        alt = pl.cdiv(rows, steps + 1)
        alt = max(pl.cdiv(alt, sub) * sub, sub)
        if alt >= floor_tm and pl.cdiv(rows, alt) % 2 == 0:
            tm = alt
    return tm


def gelu_pallas(x: jax.Array, approximate: bool = False) -> jax.Array:
    """Apply GELU elementwise to `x` of arbitrary shape via a Pallas kernel.

    approximate=False (default) matches torch.nn.functional.gelu's exact erf.
    """
    orig_shape = x.shape
    dtype = x.dtype
    itemsize = jnp.dtype(dtype).itemsize
    sub = _sublane_multiple(dtype)

    n = x.size
    if n == 0:
        return x

    # ---- lane-dense 2D slab (rows, cols) ---------------------------------
    pad = 0
    if n % 128 == 0:
        cols = 128
        for c in (1024, 512, 256, 128):
            if n % c == 0:
                cols = c
                break
        x2 = x.reshape(-1, cols)  # row-major reshape: free (bitcast) in XLA
    else:
        # Pad the flat slab up to a lane-dense width (pad < 4 KiB), run
        # lane-dense, slice back afterwards. Far cheaper than lane-sparse tiles.
        cols = min(1024, 128 * pl.cdiv(n, 128))
        padded_n = cols * pl.cdiv(n, cols)
        pad = padded_n - n
        x2 = jnp.pad(x.reshape(-1), (0, pad)).reshape(-1, cols)
    rows = x2.shape[0]

    # ---- VMEM-budget-driven block sizing ----------------------------------
    vmem_cap = _vmem_capacity_bytes()
    # in + out, each double-buffered; 1-2 MiB blocks already hit ~85% of the
    # HBM roofline, so cap at 4 MiB (VMEM headroom on v7x / v5e).
    block_budget = min(max(vmem_cap // 16, 1 << 20), 4 << 20)
    tm = _pick_row_tile(rows, cols, itemsize, sub, block_budget)

    block_bytes = tm * cols * itemsize
    vmem_limit = int(min(vmem_cap, max(32 << 20, 8 * block_bytes)))

    kernel = _gelu_tanh_kernel if approximate else _gelu_exact_kernel

    out = pl.pallas_call(
        kernel,
        out_shape=jax.ShapeDtypeStruct((rows, cols), dtype),
        grid_spec=pltpu.PrefetchScalarGridSpec(
            num_scalar_prefetch=0,
            grid=(pl.cdiv(rows, tm),),          # 1D grid over rows (lane-dense)
            in_specs=[pl.BlockSpec((tm, cols), lambda i: (i, 0))],
            out_specs=pl.BlockSpec((tm, cols), lambda i: (i, 0)),
        ),
        compiler_params=pltpu.CompilerParams(
            dimension_semantics=("parallel",),
            vmem_limit_bytes=vmem_limit,
        ),
    )(x2)

    if pad:
        return out.reshape(-1)[:n].reshape(orig_shape)
    return out.reshape(orig_shape)


def gelu_reference(x: jax.Array) -> jax.Array:
    """Plain-JAX reference (exact erf GELU)."""
    xf = x.astype(jnp.float32)
    y = xf * 0.5 * (1.0 + lax.erf(xf * jnp.float32(_INV_SQRT2)))
    return y.astype(x.dtype)


if __name__ == "__main__":
    key = jax.random.PRNGKey(0)

    # Small GPT-like activation: (batch=2, seq=8, hidden=128), f32.
    x = jax.random.normal(key, (2, 8, 128), dtype=jnp.float32)
    y = gelu_pallas(x)
    jax.block_until_ready(y)
    y_ref = gelu_reference(x)
    assert y.shape == x.shape and y.dtype == x.dtype
    assert jnp.allclose(y, y_ref, atol=1e-5, rtol=1e-5), "f32 mismatch vs reference"

    # Exercise the padded lane-dense path (element count not 128-divisible), bf16 I/O.
    xb = jax.random.normal(jax.random.PRNGKey(1), (3, 5, 7), dtype=jnp.bfloat16)
    yb = gelu_pallas(xb)
    jax.block_until_ready(yb)
    yb_ref = gelu_reference(xb)
    assert yb.shape == xb.shape and yb.dtype == xb.dtype
    assert jnp.allclose(yb.astype(jnp.float32), yb_ref.astype(jnp.float32),
                        atol=1e-2, rtol=1e-2), "bf16 mismatch vs reference"

    # Larger awkward row count (exercises the ragged-last-block tile guard).
    xc = jax.random.normal(jax.random.PRNGKey(2), (8 * 131, 1024), dtype=jnp.float32)
    yc = gelu_pallas(xc)
    jax.block_until_ready(yc)
    yc_ref = gelu_reference(xc)
    assert jnp.allclose(yc, yc_ref, atol=1e-5, rtol=1e-5), "ragged mismatch vs reference"

    print("KERNEL_OK")
</pallas_src>

<mosaic_0001>
module attributes {stable_mosaic.version = 11 : i64} {
  func.func @_gelu_exact_kernel(%arg0: i32, %arg1: memref<2x1024xf32, #tpu.memory_space<vmem>>, %arg2: memref<2x1024xf32, #tpu.memory_space<vmem>>) attributes {dimension_semantics = [#tpu.dimension_semantics<parallel>], iteration_bounds = array<i64: 1>, scalar_prefetch = 0 : i64, scratch_operands = 0 : i64, tpu.core_type = #tpu.core_type<tc>, window_params = [{transform_indices = @transform_0, window_bounds = array<i64: 2, 1024>}, {transform_indices = @transform_1, window_bounds = array<i64: 2, 1024>}]} {
    %c0 = arith.constant 0 : index
    %c0_0 = arith.constant 0 : index
    %0 = vector.load %arg1[%c0, %c0_0] : memref<2x1024xf32, #tpu.memory_space<vmem>>, vector<2x1024xf32>
    %cst = arith.constant 0.707106769 : f32
    %1 = vector.broadcast %cst : f32 to vector<2x1024xf32>
    %2 = arith.mulf %0, %1 : vector<2x1024xf32>
    %3 = math.erf %2 : vector<2x1024xf32>
    %cst_1 = arith.constant 5.000000e-01 : f32
    %4 = vector.broadcast %cst_1 : f32 to vector<2x1024xf32>
    %5 = arith.mulf %4, %3 : vector<2x1024xf32>
    %cst_2 = arith.constant 5.000000e-01 : f32
    %6 = vector.broadcast %cst_2 : f32 to vector<2x1024xf32>
    %7 = arith.addf %6, %5 : vector<2x1024xf32>
    %8 = arith.mulf %0, %7 : vector<2x1024xf32>
    %c0_3 = arith.constant 0 : index
    %c0_4 = arith.constant 0 : index
    %9 = vector.load %arg2[%c0_3, %c0_4] : memref<2x1024xf32, #tpu.memory_space<vmem>>, vector<2x1024xf32>
    tpu.vector_store %arg2[%c0_3, %c0_4], %8 {strides = array<i32>} : memref<2x1024xf32, #tpu.memory_space<vmem>>, vector<2x1024xf32>,
    return
  }
  func.func @transform_0(%arg0: i32) -> (i32, i32) {
    %c0_i32 = arith.constant 0 : i32
    %c0_i32_0 = arith.constant 0 : i32
    return %arg0, %c0_i32 : i32, i32
  }
  func.func @transform_1(%arg0: i32) -> (i32, i32) {
    %c0_i32 = arith.constant 0 : i32
    %c0_i32_0 = arith.constant 0 : i32
    return %arg0, %c0_i32 : i32, i32
  }
}

</mosaic_0001>

<llo_original>
// kernel: tpu_custom_call.1
$region0: #{tpu_custom_call.1}
  #allocation0 [shape = 'u32[]', space=smem, size = 0x4, offset = 0x4, fixed_abs, tag = 'smem constant byte address 0x4 - core index']
  #allocation1 [shape = 'u32[144,128]{1,0:T(1,128)}', space=vmem, size = 0x12000, scoped, tag = 'internal scratch']
  %s0 = inlined_call_operand.hbm [shape: f32[2,1024], index: 0, kind: input, shape index: {}]
  %s1 = inlined_call_operand.hbm [shape: f32[2,1024], index: 1, kind: output, shape index: {}]
  %s2 = sld [smem:[#allocation0]]
  $region18: #{tpu_custom_call.1} parent=0
    _
  %s4 = ssub.s32 1, %s2
  %s5 = scalar_select 0, %s4, %s2
  $region1: #{tpu_custom_call.1} parent=0
    #allocation2 [shape = 'u8[8192]{0}', space=vmem, size = 0x2000, scoped, tag = 'input window, operand 0, single buffered']
    #allocation3 [shape = 's32[1]{0}', space=sflag, size = 0x4, scoped, tag = 'scoped memory for tpu_custom_call.1']
    #allocation4 [shape = 's32[1]{0}', space=sflag, size = 0x4, scoped, tag = 'scoped memory for tpu_custom_call.1']
    #allocation5 [shape = 'u8[8192]{0}', space=vmem, size = 0x2000, scoped, tag = 'output window, operand 0, single buffered']
    %6 = vsyncpa [#allocation3], 0
    %7 = vsyncpa [#allocation4], 0
    // Predicated region
    $region2: #{tpu_custom_call.1} parent=1 // pred_check
      _
    $region3: #{tpu_custom_call.1} parent=1 // pred_check_branch
      %9 = sbr.rel (0) target = $region5
    $region4: #{tpu_custom_call.1} parent=1 // pred_region
      %s11 = ssub.s32 256, 256
      %12 = vsyncadd [#allocation3], %s11
      %s14 = sshll.u32 [#allocation2], 4
      %s15 = int_to_ptr.vmem [resolvable:$true] %s14
      %17 = dma.hbm_to_vmem [thread:$0]  %s0, 256, %s15, [#allocation3]
    $region5: #{tpu_custom_call.1} parent=1 // pred_fallthru
      _
    // Predicated region
    $region6: #{tpu_custom_call.1} parent=1 // pred_check
      _
    $region7: #{tpu_custom_call.1} parent=1 // pred_check_branch
      %19 = sbr.rel (0) target = $region9
    $region8: #{tpu_custom_call.1} parent=1 // pred_region
      %20 = dma.done [#allocation3], 256
    $region9: #{tpu_custom_call.1} parent=1 // pred_fallthru
      _
    %v21 = vld [vmem:[#allocation2] sm:$0xff]
    %v22 = vld [vmem:[#allocation2 + $0x8] sm:$0xff]
    %v23 = vmul.f32 %v21, 0.70710677
    %v24 = vmul.f32 %v22, 0.70710677
    %v25 = verf.f32.pop %v23
    %v26 = verf.f32.pop %v24
    %v27 = vmul.f32 %v25, 0.5
    %v28 = vmul.f32 %v26, 0.5
    %v29 = vadd.f32 %v27, 0.5
    %v30 = vadd.f32 %v28, 0.5
    %v31 = vmul.f32 %v21, %v29
    %v32 = vmul.f32 %v22, %v30
    %33 = vst [vmem:[#allocation5] sm:$0xff] %v31
    %34 = vst [vmem:[#allocation5 + $0x8] sm:$0xff] %v32
    // Predicated region
    $region10: #{tpu_custom_call.1} parent=1 // pred_check
      _
    $region11: #{tpu_custom_call.1} parent=1 // pred_check_branch
      %36 = sbr.rel (0) target = $region13
    $region12: #{tpu_custom_call.1} parent=1 // pred_region
      %s38 = ssub.s32 256, 256
      %39 = vsyncadd [#allocation4], %s38
      %s41 = sshll.u32 [#allocation5], 4
      %s42 = int_to_ptr.vmem [resolvable:$true] %s41
      %44 = dma.vmem_to_hbm [thread:$0]  %s42, 256, %s1, [#allocation4]
    $region13: #{tpu_custom_call.1} parent=1 // pred_fallthru
      _
    // Predicated region
    $region14: #{tpu_custom_call.1} parent=1 // pred_check
      _
    $region15: #{tpu_custom_call.1} parent=1 // pred_check_branch
      %46 = sbr.rel (0) target = $region17
    $region16: #{tpu_custom_call.1} parent=1 // pred_region
      %47 = dma.done [#allocation4], 256
    $region17: #{tpu_custom_call.1} parent=1 // pred_fallthru
      _
    %48 = vsyncpa [#allocation3], 1
    %49 = vsyncpa [#allocation4], 1

</llo_original>
